<compile_context>
chip_gen: v7x
topology: tpu7x:2x2x1
jax: 0.10.0
libtpu: 0.0.40
codegen_flags: <defaults>
</compile_context>

<pallas_src>
import functools

import jax
import jax.numpy as jnp
import numpy as np
from jax import lax
from jax.experimental import pallas as pl
from jax.experimental.pallas import tpu as pltpu

BN_EPS = 1e-5
MAX_NORM = 1.0
RENORM_EPS = 1e-7


def _build_layout(input_size, vocab_lens, hidden_sizes):
    """Static row offsets of every weight block inside the single packed slab.

    Every block starts on an 8-row (sublane-tile) boundary.
    """
    r8 = lambda n: (n + 7) // 8 * 8
    sum_vocab = sum(vocab_lens)
    layout = {}
    row = 0
    layout["w1x"] = row; row += r8(input_size)        # W1 rows for the numeric inputs
    layout["mall"] = row; row += r8(sum_vocab)        # renorm(T) @ W1 rows (fused emb)
    w_offs = [-1]                                      # layer 0 is split (w1x + mall)
    g_offs = [row]; row += 8
    b_offs = [row]; row += 8
    prev = hidden_sizes[0]
    for size in hidden_sizes[1:]:
        w_offs.append(row); row += r8(prev)
        g_offs.append(row); row += 8
        b_offs.append(row); row += 8
        prev = size
    layout["w"] = tuple(w_offs)
    layout["gamma"] = tuple(g_offs)
    layout["beta"] = tuple(b_offs)
    layout["w3"] = row; row += r8(prev)               # final weight stored as a column
    layout["b3"] = row; row += 8
    rows = row
    cols = max(hidden_sizes)
    return layout, rows, cols, sum_vocab


def _fused_kernel(x_ref, idx_ref, w_ref, o_ref, *,
                  input_size, vocab_lens, hidden_sizes, layout, sum_vocab):
    """Fused Embedding(max_norm folded) -> [Linear -> BN(train) -> ReLU]*N -> Linear."""
    batch = x_ref.shape[0]
    h1 = hidden_sizes[0]

    # ---- single offset one-hot over all categorical features: (B, sum_vocab) ----
    iota = lax.broadcasted_iota(jnp.int32, (batch, sum_vocab), 1)
    onehot = None
    col = 0
    for i, vocab in enumerate(vocab_lens):
        hit = (iota == (idx_ref[:, i:i + 1] + col)).astype(jnp.float32)
        onehot = hit if onehot is None else onehot + hit
        col += vocab

    # ---- layer 1: embedding lookup + hstack + Linear fused into 2 MXU ops ----
    w1x = w_ref[layout["w1x"]:layout["w1x"] + input_size, 0:h1]
    mall = w_ref[layout["mall"]:layout["mall"] + sum_vocab, 0:h1]
    h = (jnp.dot(x_ref[...], w1x, preferred_element_type=jnp.float32)
         + jnp.dot(onehot, mall, preferred_element_type=jnp.float32))

    inv_b = 1.0 / batch
    prev = h1
    for li, size in enumerate(hidden_sizes):
        if li > 0:
            w = w_ref[layout["w"][li]:layout["w"][li] + prev, 0:size]
            h = jnp.dot(h, w, preferred_element_type=jnp.float32)
        gamma = w_ref[layout["gamma"][li]:layout["gamma"][li] + 1, 0:size]
        beta = w_ref[layout["beta"][li]:layout["beta"][li] + 1, 0:size]
        # BatchNorm1d training-mode (biased batch stats): one-pass sum / sum-of-squares,
        # folded to a single scale/shift. Linear biases are exactly cancelled here.
        s1 = jnp.sum(h, axis=0, keepdims=True)
        s2 = jnp.sum(h * h, axis=0, keepdims=True)
        mean = s1 * inv_b
        var = jnp.maximum(s2 * inv_b - mean * mean, 0.0)
        scale = gamma * lax.rsqrt(var + BN_EPS)
        shift = beta - mean * scale
        h = jnp.maximum(h * scale + shift, 0.0)
        prev = size

    # ---- final Linear: plain (B, prev) @ (prev, 1) dot, w3 stored as a column ----
    w3 = w_ref[layout["w3"]:layout["w3"] + prev, 0:1]
    b3 = w_ref[layout["b3"]:layout["b3"] + 1, 0:1]
    o_ref[...] = jnp.dot(h, w3, preferred_element_type=jnp.float32) + b3


def simple_model_forward(inputs, indices, slab, *, input_size, vocab_lens,
                         embedding_dim, hidden_sizes):
    """Single pallas_call; 3 operands (x, idx, packed weights), all VMEM-resident."""
    del embedding_dim  # folded into the slab host-side
    batch = inputs.shape[0]
    layout, _, _, sum_vocab = _build_layout(input_size, vocab_lens, hidden_sizes)
    kernel = functools.partial(
        _fused_kernel,
        input_size=input_size,
        vocab_lens=tuple(vocab_lens),
        hidden_sizes=tuple(hidden_sizes),
        layout=layout,
        sum_vocab=sum_vocab,
    )
    vmem = pl.BlockSpec(memory_space=pltpu.MemorySpace.VMEM)
    return pl.pallas_call(
        kernel,
        out_shape=jax.ShapeDtypeStruct((batch, 1), jnp.float32),
        in_specs=[vmem, vmem, vmem],
        out_specs=vmem,
    )(inputs, indices, slab)


def pack_params(raw, input_size, vocab_lens, embedding_dim, hidden_sizes):
    """Host-side packing: fold max_norm renorm + embedding@W1 into one weight slab."""
    layout, rows, cols, _ = _build_layout(input_size, vocab_lens, hidden_sizes)
    h1 = hidden_sizes[0]
    slab = np.zeros((rows, cols), np.float32)

    W1 = np.asarray(raw["Ws"][0], np.float32)                 # (feat, hidden1)
    slab[layout["w1x"]:layout["w1x"] + input_size, :h1] = W1[:input_size]

    # M_all: renormed table rows pre-multiplied by the matching row-slice of W1.
    r = layout["mall"]
    for i, (vocab, T) in enumerate(zip(vocab_lens, raw["emb_tables"])):
        T = np.asarray(T, np.float32)
        norm = np.sqrt(np.sum(T * T, axis=-1, keepdims=True))
        scale = np.where(norm > MAX_NORM, MAX_NORM / (norm + RENORM_EPS), 1.0)
        w_rows = W1[input_size + i * embedding_dim:
                    input_size + (i + 1) * embedding_dim]
        slab[r:r + vocab, :h1] = (T * scale).astype(np.float32) @ w_rows
        r += vocab

    for li, size in enumerate(hidden_sizes):
        if li > 0:
            W = np.asarray(raw["Ws"][li], np.float32)          # (prev, size)
            slab[layout["w"][li]:layout["w"][li] + W.shape[0], :size] = W
        slab[layout["gamma"][li], :size] = np.asarray(raw["gammas"][li], np.float32)
        slab[layout["beta"][li], :size] = np.asarray(raw["betas"][li], np.float32)
        # b1/b2 intentionally omitted: exactly cancelled by BN mean subtraction.

    last = hidden_sizes[-1]
    slab[layout["w3"]:layout["w3"] + last, 0:1] = np.asarray(raw["w3"], np.float32)
    slab[layout["b3"], 0] = np.asarray(raw["b3"], np.float32)[0]
    return jnp.asarray(slab)


def init_params(key, input_size, vocab_lens, embedding_dim, hidden_sizes):
    """Deterministic synthetic parameters: raw (for the reference) + packed slab."""
    n_cat = len(vocab_lens)
    n_keys = n_cat + 4 * len(hidden_sizes) + 2
    keys = iter(jax.random.split(key, n_keys))

    emb_tables = [jax.random.normal(next(keys), (v, embedding_dim), jnp.float32)
                  for v in vocab_lens]

    feat = input_size + n_cat * embedding_dim
    dims = [feat] + list(hidden_sizes)
    Ws, bs, gammas, betas = [], [], [], []
    for prev, size in zip(dims[:-1], dims[1:]):
        Ws.append(0.1 * jax.random.normal(next(keys), (prev, size), jnp.float32))
        bs.append(0.01 * jax.random.normal(next(keys), (size,), jnp.float32))
        gammas.append(1.0 + 0.1 * jax.random.normal(next(keys), (size,), jnp.float32))
        betas.append(0.1 * jax.random.normal(next(keys), (size,), jnp.float32))

    w3 = 0.1 * jax.random.normal(next(keys), (dims[-1], 1), jnp.float32)
    b3 = 0.01 * jax.random.normal(next(keys), (1,), jnp.float32)

    raw = dict(emb_tables=emb_tables, Ws=Ws, bs=bs, gammas=gammas, betas=betas,
               w3=w3, b3=b3)
    slab = pack_params(raw, input_size, vocab_lens, embedding_dim, hidden_sizes)
    return raw, slab


def reference_forward(inputs, indices, raw, *, vocab_lens, hidden_sizes):
    """Pure-JAX reference mirroring the torch module (gather + concat + bias + BN)."""
    pieces = [inputs]
    for i, T in enumerate(raw["emb_tables"]):
        rows = jnp.take(T, indices[:, i], axis=0)
        norm = jnp.sqrt(jnp.sum(rows * rows, axis=-1, keepdims=True))
        scale = jnp.where(norm > MAX_NORM, MAX_NORM / (norm + RENORM_EPS), 1.0)
        pieces.append(rows * scale)
    h = jnp.concatenate(pieces, axis=-1)
    for li, _ in enumerate(hidden_sizes):
        h = jnp.dot(h, raw["Ws"][li], precision=lax.Precision.HIGHEST) + raw["bs"][li]
        mean = jnp.mean(h, axis=0, keepdims=True)
        var = jnp.mean((h - mean) ** 2, axis=0, keepdims=True)
        h = (h - mean) / jnp.sqrt(var + BN_EPS) * raw["gammas"][li] + raw["betas"][li]
        h = jnp.maximum(h, 0.0)
    return jnp.dot(h, raw["w3"], precision=lax.Precision.HIGHEST) + raw["b3"]


if __name__ == "__main__":
    # Small shapes consistent with the module.
    batch = 8
    input_size = 6
    vocab_lens = [10, 7]
    embedding_dim = 4
    hidden_sizes = [32, 16]

    key = jax.random.PRNGKey(0)
    k_param, k_x, k_i0, k_i1 = jax.random.split(key, 4)

    raw, slab = init_params(k_param, input_size, vocab_lens, embedding_dim,
                            hidden_sizes)

    inputs = jax.random.normal(k_x, (batch, input_size), dtype=jnp.float32)
    indices = jnp.stack(
        [
            jax.random.randint(k_i0, (batch,), 0, vocab_lens[0]),
            jax.random.randint(k_i1, (batch,), 0, vocab_lens[1]),
        ],
        axis=1,
    ).astype(jnp.int32)

    cfg = dict(input_size=input_size, vocab_lens=vocab_lens,
               embedding_dim=embedding_dim, hidden_sizes=hidden_sizes)

    out = simple_model_forward(inputs, indices, slab, **cfg)
    out = jax.block_until_ready(out)
    assert out.shape == (batch, 1), out.shape

    ref = reference_forward(inputs, indices, raw, vocab_lens=vocab_lens,
                            hidden_sizes=hidden_sizes)
    np.testing.assert_allclose(np.asarray(out), np.asarray(ref), rtol=5e-3, atol=5e-3)

    print("KERNEL_OK")
</pallas_src>

<mosaic_0001>
module attributes {stable_mosaic.version = 11 : i64} {
  func.func @_fused_kernel(%arg0: memref<8x6xf32, #tpu.memory_space<vmem>>, %arg1: memref<8x2xi32, #tpu.memory_space<vmem>>, %arg2: memref<120x32xf32, #tpu.memory_space<vmem>>, %arg3: memref<8x1xf32, #tpu.memory_space<vmem>>) attributes {dimension_semantics = [], scalar_prefetch = 0 : i64, scratch_operands = 0 : i64, tpu.core_type = #tpu.core_type<tc>} {
    %0 = tpu.iota {dimensions = array<i32: 1>} : vector<8x17xi32>
    %c0 = arith.constant 0 : index
    %c0_0 = arith.constant 0 : index
    %1 = vector.load %arg1[%c0, %c0_0] : memref<8x2xi32, #tpu.memory_space<vmem>>, vector<8x1xi32>
    %c0_i32 = arith.constant 0 : i32
    %2 = vector.broadcast %c0_i32 : i32 to vector<8x1xi32>
    %3 = arith.addi %1, %2 : vector<8x1xi32>
    %4 = vector.broadcast %3 : vector<8x1xi32> to vector<8x17xi32>
    %5 = arith.cmpi eq, %0, %4 : vector<8x17xi32>
    %6 = arith.extui %5 : vector<8x17xi1> to vector<8x17xi32>
    %7 = arith.sitofp %6 : vector<8x17xi32> to vector<8x17xf32>
    %c0_1 = arith.constant 0 : index
    %c1 = arith.constant 1 : index
    %8 = vector.load %arg1[%c0_1, %c1] : memref<8x2xi32, #tpu.memory_space<vmem>>, vector<8x1xi32>
    %c10_i32 = arith.constant 10 : i32
    %9 = vector.broadcast %c10_i32 : i32 to vector<8x1xi32>
    %10 = arith.addi %8, %9 : vector<8x1xi32>
    %11 = vector.broadcast %10 : vector<8x1xi32> to vector<8x17xi32>
    %12 = arith.cmpi eq, %0, %11 : vector<8x17xi32>
    %13 = arith.extui %12 : vector<8x17xi1> to vector<8x17xi32>
    %14 = arith.sitofp %13 : vector<8x17xi32> to vector<8x17xf32>
    %15 = arith.addf %7, %14 : vector<8x17xf32>
    %c0_2 = arith.constant 0 : index
    %c0_3 = arith.constant 0 : index
    %16 = vector.load %arg2[%c0_2, %c0_3] : memref<120x32xf32, #tpu.memory_space<vmem>>, vector<6x32xf32>
    %c8 = arith.constant 8 : index
    %c0_4 = arith.constant 0 : index
    %17 = vector.load %arg2[%c8, %c0_4] : memref<120x32xf32, #tpu.memory_space<vmem>>, vector<17x32xf32>
    %c0_5 = arith.constant 0 : index
    %c0_6 = arith.constant 0 : index
    %18 = vector.load %arg0[%c0_5, %c0_6] : memref<8x6xf32, #tpu.memory_space<vmem>>, vector<8x6xf32>
    %cst = arith.constant dense<0.000000e+00> : vector<8x32xf32>
    %19 = tpu.matmul %18, %16, %cst {dimension_numbers = #tpu.dot_dimension_numbers<[1], [0], [0], [1], [0, 0, 1, 1], [], []>} : vector<8x6xf32>, vector<6x32xf32>, vector<8x32xf32> -> vector<8x32xf32>
    %cst_7 = arith.constant dense<0.000000e+00> : vector<8x32xf32>
    %20 = tpu.matmul %15, %17, %cst_7 {dimension_numbers = #tpu.dot_dimension_numbers<[1], [0], [0], [1], [0, 0, 1, 1], [], []>} : vector<8x17xf32>, vector<17x32xf32>, vector<8x32xf32> -> vector<8x32xf32>
    %21 = arith.addf %19, %20 : vector<8x32xf32>
    %c32 = arith.constant 32 : index
    %c0_8 = arith.constant 0 : index
    %22 = vector.load %arg2[%c32, %c0_8] : memref<120x32xf32, #tpu.memory_space<vmem>>, vector<1x32xf32>
    %c40 = arith.constant 40 : index
    %c0_9 = arith.constant 0 : index
    %23 = vector.load %arg2[%c40, %c0_9] : memref<120x32xf32, #tpu.memory_space<vmem>>, vector<1x32xf32>
    %cst_10 = arith.constant dense<0.000000e+00> : vector<32xf32>
    %24 = vector.multi_reduction <add>, %21, %cst_10 [0] : vector<8x32xf32> to vector<32xf32>
    %25 = vector.shape_cast %24 : vector<32xf32> to vector<1x32xf32>
    %26 = arith.mulf %21, %21 : vector<8x32xf32>
    %cst_11 = arith.constant dense<0.000000e+00> : vector<32xf32>
    %27 = vector.multi_reduction <add>, %26, %cst_11 [0] : vector<8x32xf32> to vector<32xf32>
    %28 = vector.shape_cast %27 : vector<32xf32> to vector<1x32xf32>
    %cst_12 = arith.constant 1.250000e-01 : f32
    %29 = vector.broadcast %cst_12 : f32 to vector<1x32xf32>
    %30 = arith.mulf %25, %29 : vector<1x32xf32>
    %cst_13 = arith.constant 1.250000e-01 : f32
    %31 = vector.broadcast %cst_13 : f32 to vector<1x32xf32>
    %32 = arith.mulf %28, %31 : vector<1x32xf32>
    %33 = arith.mulf %30, %30 : vector<1x32xf32>
    %34 = arith.subf %32, %33 : vector<1x32xf32>
    %cst_14 = arith.constant 0.000000e+00 : f32
    %35 = vector.broadcast %cst_14 : f32 to vector<1x32xf32>
    %36 = arith.maximumf %34, %35 : vector<1x32xf32>
    %cst_15 = arith.constant 9.99999974E-6 : f32
    %37 = vector.broadcast %cst_15 : f32 to vector<1x32xf32>
    %38 = arith.addf %36, %37 : vector<1x32xf32>
    %39 = math.rsqrt %38 : vector<1x32xf32>
    %40 = arith.mulf %22, %39 : vector<1x32xf32>
    %41 = arith.mulf %30, %40 : vector<1x32xf32>
    %42 = arith.subf %23, %41 : vector<1x32xf32>
    %43 = vector.broadcast %40 : vector<1x32xf32> to vector<8x32xf32>
    %44 = arith.mulf %21, %43 : vector<8x32xf32>
    %45 = vector.broadcast %42 : vector<1x32xf32> to vector<8x32xf32>
    %46 = arith.addf %44, %45 : vector<8x32xf32>
    %cst_16 = arith.constant 0.000000e+00 : f32
    %47 = vector.broadcast %cst_16 : f32 to vector<8x32xf32>
    %48 = arith.maximumf %46, %47 : vector<8x32xf32>
    %c48 = arith.constant 48 : index
    %c0_17 = arith.constant 0 : index
    %49 = vector.load %arg2[%c48, %c0_17] : memref<120x32xf32, #tpu.memory_space<vmem>>, vector<32x16xf32>
    %cst_18 = arith.constant dense<0.000000e+00> : vector<8x16xf32>
    %50 = tpu.matmul %48, %49, %cst_18 {dimension_numbers = #tpu.dot_dimension_numbers<[1], [0], [0], [1], [0, 0, 1, 1], [], []>} : vector<8x32xf32>, vector<32x16xf32>, vector<8x16xf32> -> vector<8x16xf32>
    %c80 = arith.constant 80 : index
    %c0_19 = arith.constant 0 : index
    %51 = vector.load %arg2[%c80, %c0_19] : memref<120x32xf32, #tpu.memory_space<vmem>>, vector<1x16xf32>
    %c88 = arith.constant 88 : index
    %c0_20 = arith.constant 0 : index
    %52 = vector.load %arg2[%c88, %c0_20] : memref<120x32xf32, #tpu.memory_space<vmem>>, vector<1x16xf32>
    %cst_21 = arith.constant dense<0.000000e+00> : vector<16xf32>
    %53 = vector.multi_reduction <add>, %50, %cst_21 [0] : vector<8x16xf32> to vector<16xf32>
    %54 = vector.shape_cast %53 : vector<16xf32> to vector<1x16xf32>
    %55 = arith.mulf %50, %50 : vector<8x16xf32>
    %cst_22 = arith.constant dense<0.000000e+00> : vector<16xf32>
    %56 = vector.multi_reduction <add>, %55, %cst_22 [0] : vector<8x16xf32> to vector<16xf32>
    %57 = vector.shape_cast %56 : vector<16xf32> to vector<1x16xf32>
    %cst_23 = arith.constant 1.250000e-01 : f32
    %58 = vector.broadcast %cst_23 : f32 to vector<1x16xf32>
    %59 = arith.mulf %54, %58 : vector<1x16xf32>
    %cst_24 = arith.constant 1.250000e-01 : f32
    %60 = vector.broadcast %cst_24 : f32 to vector<1x16xf32>
    %61 = arith.mulf %57, %60 : vector<1x16xf32>
    %62 = arith.mulf %59, %59 : vector<1x16xf32>
    %63 = arith.subf %61, %62 : vector<1x16xf32>
    %cst_25 = arith.constant 0.000000e+00 : f32
    %64 = vector.broadcast %cst_25 : f32 to vector<1x16xf32>
    %65 = arith.maximumf %63, %64 : vector<1x16xf32>
    %cst_26 = arith.constant 9.99999974E-6 : f32
    %66 = vector.broadcast %cst_26 : f32 to vector<1x16xf32>
    %67 = arith.addf %65, %66 : vector<1x16xf32>
    %68 = math.rsqrt %67 : vector<1x16xf32>
    %69 = arith.mulf %51, %68 : vector<1x16xf32>
    %70 = arith.mulf %59, %69 : vector<1x16xf32>
    %71 = arith.subf %52, %70 : vector<1x16xf32>
    %72 = vector.broadcast %69 : vector<1x16xf32> to vector<8x16xf32>
    %73 = arith.mulf %50, %72 : vector<8x16xf32>
    %74 = vector.broadcast %71 : vector<1x16xf32> to vector<8x16xf32>
    %75 = arith.addf %73, %74 : vector<8x16xf32>
    %cst_27 = arith.constant 0.000000e+00 : f32
    %76 = vector.broadcast %cst_27 : f32 to vector<8x16xf32>
    %77 = arith.maximumf %75, %76 : vector<8x16xf32>
    %c96 = arith.constant 96 : index
    %c0_28 = arith.constant 0 : index
    %78 = vector.load %arg2[%c96, %c0_28] : memref<120x32xf32, #tpu.memory_space<vmem>>, vector<16x1xf32>
    %c112 = arith.constant 112 : index
    %c0_29 = arith.constant 0 : index
    %79 = vector.load %arg2[%c112, %c0_29] : memref<120x32xf32, #tpu.memory_space<vmem>>, vector<1x1xf32>
    %cst_30 = arith.constant dense<0.000000e+00> : vector<8x1xf32>
    %80 = tpu.matmul %77, %78, %cst_30 {dimension_numbers = #tpu.dot_dimension_numbers<[1], [0], [0], [1], [0, 0, 1, 1], [], []>} : vector<8x16xf32>, vector<16x1xf32>, vector<8x1xf32> -> vector<8x1xf32>
    %81 = vector.broadcast %79 : vector<1x1xf32> to vector<8x1xf32>
    %82 = arith.addf %80, %81 : vector<8x1xf32>
    %c0_31 = arith.constant 0 : index
    %c0_32 = arith.constant 0 : index
    %83 = vector.load %arg3[%c0_31, %c0_32] : memref<8x1xf32, #tpu.memory_space<vmem>>, vector<8x1xf32>
    tpu.vector_store %arg3[%c0_31, %c0_32], %82 {strides = array<i32>} : memref<8x1xf32, #tpu.memory_space<vmem>>, vector<8x1xf32>,
    return
  }
}

</mosaic_0001>

<llo_original>
// kernel: tpu_custom_call.1
$region0: #{tpu_custom_call.1}
  #allocation0 [shape = 'u32[]', space=smem, size = 0x4, offset = 0x4, fixed_abs, tag = 'smem constant byte address 0x4 - core index']
  #allocation1 [shape = 'u32[144,128]{1,0:T(1,128)}', space=vmem, size = 0x12000, scoped, tag = 'internal scratch']
  %s0 = inlined_call_operand.vmem [shape: f32[8,6], index: 0, kind: input, shape index: {}]
  %s1 = inlined_call_operand.vmem [shape: s32[8,2], index: 1, kind: input, shape index: {}]
  %s2 = inlined_call_operand.vmem [shape: f32[120,32], index: 2, kind: input, shape index: {}]
  %s3 = inlined_call_operand.vmem [shape: f32[8,1], index: 3, kind: output, shape index: {}]
  %s4 = sld [smem:[#allocation0]]
  $region22: #{tpu_custom_call.1} parent=0
    _
  %s6 = ssub.s32 1, %s4
  %s7 = scalar_select 0, %s6, %s4
  // Predicated region
  $region2: #{tpu_custom_call.1} parent=0 // pred_check
    _
  $region3: #{tpu_custom_call.1} parent=0 // pred_check_branch
    %9 = sbr.rel (0) target = $region5
  $region4: #{tpu_custom_call.1} parent=0 // pred_region
    _
  $region5: #{tpu_custom_call.1} parent=0 // pred_fallthru
    _
  // Predicated region
  $region6: #{tpu_custom_call.1} parent=0 // pred_check
    _
  $region7: #{tpu_custom_call.1} parent=0 // pred_check_branch
    %11 = sbr.rel (0) target = $region9
  $region8: #{tpu_custom_call.1} parent=0 // pred_region
    _
  $region9: #{tpu_custom_call.1} parent=0 // pred_fallthru
    _
  // Predicated region
  $region10: #{tpu_custom_call.1} parent=0 // pred_check
    _
  $region11: #{tpu_custom_call.1} parent=0 // pred_check_branch
    %13 = sbr.rel (0) target = $region13
  $region12: #{tpu_custom_call.1} parent=0 // pred_region
    _
  $region13: #{tpu_custom_call.1} parent=0 // pred_fallthru
    _
  %v14 = vlaneseq
  %v15 = vand.u32 %v14, 127
  %v16 = vld [vmem:[%s1] sm:$0xff]
  %17 = vset.pattern.permute.xlu0 0
  %18 = vperm.xlu0 %17, %v16
  %v19 = vpop.permute.xlu0 %18
  %vm20 = vcmp.eq.s32.totalorder %v15, %v19
  %v21 = vsel %vm20, 1, 0
  %v22 = vcvt.s32.f32 %v21
  %v23 = vadd.s32 %v16, 10
  %24 = vset.pattern.permute.xlu0 1
  %25 = vperm.xlu0 %24, %v23
  %v26 = vpop.permute.xlu0 %25
  %vm27 = vcmp.eq.s32.totalorder %v15, %v26
  %v28 = vsel %vm27, 1, 0
  %v29 = vcvt.s32.f32 %v28
  %v30 = vadd.f32 %v22, %v29
  %v31 = vld [vmem:[%s2] sm:$0x3f]
  %v32 = vld [vmem:[%s2 + $0x8] sm:$0xff]
  %v33 = vld [vmem:[%s2 + $0x10] sm:$0xff]
  %v34 = vld [vmem:[%s2 + $0x18] sm:$0x1]
  %v35 = vld [vmem:[%s0] sm:$0xff]
  %vm36 = vcmask 138240
  %v38 = vsel %vm36, %v30, 0
  %vm40 = vcmask 1040384
  %v42 = vsel %vm40, %v34, 0
  %44 = vmatprep.subr.mxu0 0.0
  %45 = vmatpush1.msra.mxu0 %v32
  %46 = vmatprep.subr.mxu0 0.0
  %47 = vmatpush1.msra.mxu0 %v33
  %48 = vmatprep.subr.mxu0 0.0
  %49 = vmatpush1.msra.mxu0 %v42
  %50 = vmatprep.subr.mxu0 0.0
  %51 = vmatpush1.msra.mxu0 0.0
  %52 = vmatprep.subr.mxu0 0.0
  %53 = vmatpush1.msra.mxu0 0.0
  %54 = vmatprep.subr.mxu0 0.0
  %55 = vmatpush1.msra.mxu0 0.0
  %56 = vmatprep.subr.mxu0 0.0
  %57 = vmatpush1.msra.mxu0 0.0
  %58 = vmatprep.subr.mxu0 0.0
  %59 = vmatpush1.msra.mxu0 0.0
  %60 = vmatprep.subr.mxu0 0.0
  %61 = vmatpush1.msra.mxu0 0.0
  %62 = vmatprep.subr.mxu0 0.0
  %63 = vmatpush1.msra.mxu0 0.0
  %64 = vmatprep.subr.mxu0 0.0
  %65 = vmatpush1.msra.mxu0 0.0
  %66 = vmatprep.subr.mxu0 0.0
  %67 = vmatpush1.msra.mxu0 0.0
  %68 = vmatprep.subr.mxu0 0.0
  %69 = vmatpush1.msra.mxu0 0.0
  %70 = vmatprep.subr.mxu0 0.0
  %71 = vmatpush1.msra.mxu0 0.0
  %72 = vmatprep.subr.mxu0 0.0
  %73 = vmatpush1.msra.mxu0 0.0
  %74 = vmatprep.subr.mxu0 0.0
  %75 = vmatpush1.msra.mxu0 0.0
  %76 = vmatprep.subr.mxu0 0.0
  %77 = vmatpush1.msra.mxu0 0.0
  %78 = vmatprep.subr.mxu0 0.0
  %79 = vmatpush1.msra.mxu0 0.0
  %80 = vmatprep.subr.mxu0 0.0
  %81 = vmatpush1.msra.mxu0 0.0
  %82 = vmatprep.subr.mxu0 0.0
  %83 = vmatpush1.msra.mxu0 0.0
  %84 = vmatprep.subr.mxu0 0.0
  %85 = vmatpush1.msra.mxu0 0.0
  %86 = vmatprep.subr.mxu0 0.0
  %87 = vmatpush1.msra.mxu0 0.0
  %88 = vmatprep.subr.mxu0 0.0
  %89 = vmatpush1.msra.mxu0 0.0
  %90 = vmatprep.subr.mxu0 0.0
  %91 = vmatpush1.msra.mxu0 0.0
  %92 = vmatprep.subr.mxu0 0.0
  %93 = vmatpush1.msra.mxu0 0.0
  %94 = vmatprep.subr.mxu0 0.0
  %95 = vmatpush1.msra.mxu0 0.0
  %96 = vmatprep.subr.mxu0 0.0
  %97 = vmatpush1.msra.mxu0 0.0
  %98 = vmatprep.subr.mxu0 0.0
  %99 = vmatpush1.msra.mxu0 0.0
  %100 = vmatprep.subr.mxu0 0.0
  %101 = vmatpush1.msra.mxu0 0.0
  %102 = vmatprep.subr.mxu0 0.0
  %103 = vmatpush1.msra.mxu0 0.0
  %104 = vmatprep.subr.mxu0 0.0
  %105 = vmatpush1.msra.mxu0 0.0
  %106 = vmatprep.subr.mxu0 0.0
  %107 = vmatpush1.msra.mxu0 0.0
  %108 = vmatprep.mubr.f32.mxu0 0.0
  %109 = vmatmul.mubr.f32.gmra.mrb[0].mxu0 %v38
  %v110 = vpop.f32.mrb[0].mxu0
  %v111 = vadd.f32 0.0, %v110
  %v112 = vpop.f32.mrb[0].mxu0
  %113 = vdwg.mxu0
  %vm114 = vcmask 48128
  %v116 = vsel %vm114, %v35, 0
  %vm118 = vcmask 1045504
  %v120 = vsel %vm118, %v31, 0
  %122 = vmatprep.subr.mxu0 0.0
  %123 = vmatpush1.msra.mxu0 %v120
  %124 = vmatprep.subr.mxu0 0.0
  %125 = vmatpush1.msra.mxu0 0.0
  %126 = vmatprep.subr.mxu0 0.0
  %127 = vmatpush1.msra.mxu0 0.0
  %128 = vmatprep.subr.mxu0 0.0
  %129 = vmatpush1.msra.mxu0 0.0
  %130 = vmatprep.subr.mxu0 0.0
  %131 = vmatpush1.msra.mxu0 0.0
  %132 = vmatprep.subr.mxu0 0.0
  %133 = vmatpush1.msra.mxu0 0.0
  %134 = vmatprep.subr.mxu0 0.0
  %135 = vmatpush1.msra.mxu0 0.0
  %136 = vmatprep.subr.mxu0 0.0
  %137 = vmatpush1.msra.mxu0 0.0
  %138 = vmatprep.subr.mxu0 0.0
  %139 = vmatpush1.msra.mxu0 0.0
  %140 = vmatprep.subr.mxu0 0.0
  %141 = vmatpush1.msra.mxu0 0.0
  %142 = vmatprep.subr.mxu0 0.0
  %143 = vmatpush1.msra.mxu0 0.0
  %144 = vmatprep.subr.mxu0 0.0
  %145 = vmatpush1.msra.mxu0 0.0
  %146 = vmatprep.subr.mxu0 0.0
  %147 = vmatpush1.msra.mxu0 0.0
  %148 = vmatprep.subr.mxu0 0.0
  %149 = vmatpush1.msra.mxu0 0.0
  %150 = vmatprep.subr.mxu0 0.0
  %151 = vmatpush1.msra.mxu0 0.0
  %152 = vmatprep.subr.mxu0 0.0
  %153 = vmatpush1.msra.mxu0 0.0
  %154 = vmatprep.subr.mxu0 0.0
  %155 = vmatpush1.msra.mxu0 0.0
  %156 = vmatprep.subr.mxu0 0.0
  %157 = vmatpush1.msra.mxu0 0.0
  %158 = vmatprep.subr.mxu0 0.0
  %159 = vmatpush1.msra.mxu0 0.0
  %160 = vmatprep.subr.mxu0 0.0
  %161 = vmatpush1.msra.mxu0 0.0
  %162 = vmatprep.subr.mxu0 0.0
  %163 = vmatpush1.msra.mxu0 0.0
  %164 = vmatprep.subr.mxu0 0.0
  %165 = vmatpush1.msra.mxu0 0.0
  %166 = vmatprep.subr.mxu0 0.0
  %167 = vmatpush1.msra.mxu0 0.0
  %168 = vmatprep.subr.mxu0 0.0
  %169 = vmatpush1.msra.mxu0 0.0
  %170 = vmatprep.subr.mxu0 0.0
  %171 = vmatpush1.msra.mxu0 0.0
  %172 = vmatprep.subr.mxu0 0.0
  %173 = vmatpush1.msra.mxu0 0.0
  %174 = vmatprep.subr.mxu0 0.0
  %175 = vmatpush1.msra.mxu0 0.0
  %176 = vmatprep.subr.mxu0 0.0
  %177 = vmatpush1.msra.mxu0 0.0
  %178 = vmatprep.subr.mxu0 0.0
  %179 = vmatpush1.msra.mxu0 0.0
  %180 = vmatprep.subr.mxu0 0.0
  %181 = vmatpush1.msra.mxu0 0.0
  %182 = vmatprep.subr.mxu0 0.0
  %183 = vmatpush1.msra.mxu0 0.0
  %184 = vmatprep.subr.mxu0 0.0
  %185 = vmatpush1.msra.mxu0 0.0
  %186 = vmatprep.mubr.f32.mxu0 0.0
  %187 = vmatmul.mubr.f32.gmra.mrb[0].mxu0 %v116
  %v188 = vpop.f32.mrb[0].mxu0
  %v189 = vadd.f32 %v111, %v188
  %v190 = vpop.f32.mrb[0].mxu0
  %191 = vdwg.mxu0
  %v192 = vld [vmem:[%s2 + $0x20] sm:$0x1]
  %v193 = vld [vmem:[%s2 + $0x28] sm:$0x1]
  %vm194 = vcmask 261120
  %v195 = vsel %vm194, %v189, 0.0
  %v196 = vrot.slane %v195, 4
  %v197 = vadd.f32 %v195, %v196
  %v198 = vrot.slane %v197, 2
  %v199 = vadd.f32 %v197, %v198
  %v200 = vrot.slane %v199, 1
  %v201 = vadd.f32 %v199, %v200
  %v202 = vmul.f32 %v189, %v189
  %v203 = vsel %vm194, %v202, 0.0
  %v204 = vrot.slane %v203, 4
  %v205 = vadd.f32 %v203, %v204
  %v206 = vrot.slane %v205, 2
  %v207 = vadd.f32 %v205, %v206
  %v208 = vrot.slane %v207, 1
  %v209 = vadd.f32 %v207, %v208
  %v210 = vmul.f32 %v201, 0.125
  %v211 = vmul.f32 %v209, 0.125
  %v212 = vmul.f32 %v210, %v210
  %v213 = vsub.f32 %v211, %v212
  %v214 = vmax.f32 %v213, 0.0
  %v215 = vadd.f32 %v214, 1e-05
  %v216 = vrsqrt.pop %v215
  %v217 = vmul.f32 %v192, %v216
  %v218 = vmul.f32 %v210, %v217
  %v219 = vsub.f32 %v193, %v218
  %v220 = vlaneseq
  %v221 = vshrl.u32 %v220, 7
  %v222 = vsub.s32 0, %v221
  %v223 = vrot.slane %v217, %v222
  %v224 = vmul.f32 %v189, %v223
  %v225 = vlaneseq
  %v226 = vshrl.u32 %v225, 7
  %v227 = vsub.s32 0, %v226
  %v228 = vrot.slane %v219, %v227
  %v229 = vadd.f32 %v224, %v228
  %v230 = vmax.f32 %v229, 0.0
  %v231 = vld [vmem:[%s2 + $0x30] sm:$0xff]
  %v232 = vld [vmem:[%s2 + $0x38] sm:$0xff]
  %v233 = vld [vmem:[%s2 + $0x40] sm:$0xff]
  %v234 = vld [vmem:[%s2 + $0x48] sm:$0xff]
  %v236 = vsel %vm194, %v230, 0
  %238 = vmatprep.subr.mxu0 0.0
  %239 = vmatpush1.msra.mxu0 %v231
  %240 = vmatprep.subr.mxu0 0.0
  %241 = vmatpush1.msra.mxu0 %v232
  %242 = vmatprep.subr.mxu0 0.0
  %243 = vmatpush1.msra.mxu0 %v233
  %244 = vmatprep.subr.mxu0 0.0
  %245 = vmatpush1.msra.mxu0 %v234
  %246 = vmatprep.subr.mxu0 0.0
  %247 = vmatpush1.msra.mxu0 0.0
  %248 = vmatprep.subr.mxu0 0.0
  %249 = vmatpush1.msra.mxu0 0.0
  %250 = vmatprep.subr.mxu0 0.0
  %251 = vmatpush1.msra.mxu0 0.0
  %252 = vmatprep.subr.mxu0 0.0
  %253 = vmatpush1.msra.mxu0 0.0
  %254 = vmatprep.subr.mxu0 0.0
  %255 = vmatpush1.msra.mxu0 0.0
  %256 = vmatprep.subr.mxu0 0.0
  %257 = vmatpush1.msra.mxu0 0.0
  %258 = vmatprep.subr.mxu0 0.0
  %259 = vmatpush1.msra.mxu0 0.0
  %260 = vmatprep.subr.mxu0 0.0
  %261 = vmatpush1.msra.mxu0 0.0
  %262 = vmatprep.subr.mxu0 0.0
  %263 = vmatpush1.msra.mxu0 0.0
  %264 = vmatprep.subr.mxu0 0.0
  %265 = vmatpush1.msra.mxu0 0.0
  %266 = vmatprep.subr.mxu0 0.0
  %267 = vmatpush1.msra.mxu0 0.0
  %268 = vmatprep.subr.mxu0 0.0
  %269 = vmatpush1.msra.mxu0 0.0
  %270 = vmatprep.subr.mxu0 0.0
  %271 = vmatpush1.msra.mxu0 0.0
  %272 = vmatprep.subr.mxu0 0.0
  %273 = vmatpush1.msra.mxu0 0.0
  %274 = vmatprep.subr.mxu0 0.0
  %275 = vmatpush1.msra.mxu0 0.0
  %276 = vmatprep.subr.mxu0 0.0
  %277 = vmatpush1.msra.mxu0 0.0
  %278 = vmatprep.subr.mxu0 0.0
  %279 = vmatpush1.msra.mxu0 0.0
  %280 = vmatprep.subr.mxu0 0.0
  %281 = vmatpush1.msra.mxu0 0.0
  %282 = vmatprep.subr.mxu0 0.0
  %283 = vmatpush1.msra.mxu0 0.0
  %284 = vmatprep.subr.mxu0 0.0
  %285 = vmatpush1.msra.mxu0 0.0
  %286 = vmatprep.subr.mxu0 0.0
  %287 = vmatpush1.msra.mxu0 0.0
  %288 = vmatprep.subr.mxu0 0.0
  %289 = vmatpush1.msra.mxu0 0.0
  %290 = vmatprep.subr.mxu0 0.0
  %291 = vmatpush1.msra.mxu0 0.0
  %292 = vmatprep.subr.mxu0 0.0
  %293 = vmatpush1.msra.mxu0 0.0
  %294 = vmatprep.subr.mxu0 0.0
  %295 = vmatpush1.msra.mxu0 0.0
  %296 = vmatprep.subr.mxu0 0.0
  %297 = vmatpush1.msra.mxu0 0.0
  %298 = vmatprep.subr.mxu0 0.0
  %299 = vmatpush1.msra.mxu0 0.0
  %300 = vmatprep.subr.mxu0 0.0
  %301 = vmatpush1.msra.mxu0 0.0
  %302 = vmatprep.mubr.f32.mxu0 0.0
  %303 = vmatmul.mubr.f32.gmra.mrb[0].mxu0 %v236
  %v304 = vpop.f32.mrb[0].mxu0
  %v305 = vadd.f32 0.0, %v304
  %v306 = vpop.f32.mrb[0].mxu0
  %307 = vdwg.mxu0
  %v308 = vld [vmem:[%s2 + $0x50] sm:$0x1]
  %v309 = vld [vmem:[%s2 + $0x58] sm:$0x1]
  %vm310 = vcmask 130048
  %v311 = vsel %vm310, %v305, 0.0
  %v312 = vrot.slane %v311, 4
  %v313 = vadd.f32 %v311, %v312
  %v314 = vrot.slane %v313, 2
  %v315 = vadd.f32 %v313, %v314
  %v316 = vrot.slane %v315, 1
  %v317 = vadd.f32 %v315, %v316
  %v318 = vmul.f32 %v305, %v305
  %v319 = vsel %vm310, %v318, 0.0
  %v320 = vrot.slane %v319, 4
  %v321 = vadd.f32 %v319, %v320
  %v322 = vrot.slane %v321, 2
  %v323 = vadd.f32 %v321, %v322
  %v324 = vrot.slane %v323, 1
  %v325 = vadd.f32 %v323, %v324
  %v326 = vmul.f32 %v317, 0.125
  %v327 = vmul.f32 %v325, 0.125
  %v328 = vmul.f32 %v326, %v326
  %v329 = vsub.f32 %v327, %v328
  %v330 = vmax.f32 %v329, 0.0
  %v331 = vadd.f32 %v330, 1e-05
  %v332 = vrsqrt.pop %v331
  %v333 = vmul.f32 %v308, %v332
  %v334 = vmul.f32 %v326, %v333
  %v335 = vsub.f32 %v309, %v334
  %v336 = vlaneseq
  %v337 = vshrl.u32 %v336, 7
  %v338 = vsub.s32 0, %v337
  %v339 = vrot.slane %v333, %v338
  %v340 = vmul.f32 %v305, %v339
  %v341 = vlaneseq
  %v342 = vshrl.u32 %v341, 7
  %v343 = vsub.s32 0, %v342
  %v344 = vrot.slane %v335, %v343
  %v345 = vadd.f32 %v340, %v344
  %v346 = vmax.f32 %v345, 0.0
  %v347 = vld [vmem:[%s2 + $0x60] sm:$0xff]
  %v348 = vld [vmem:[%s2 + $0x68] sm:$0xff]
  %v349 = vld [vmem:[%s2 + $0x70] sm:$0x1]
  %v350 = vlaneseq
  %v351 = vshrl.u32 %v350, 7
  %v352 = vsub.s32 0, %v351
  %v353 = vrot.slane %v349, %v352
  %v355 = vsel %vm310, %v346, 0
  %357 = vmatprep.subr.mxu0 0.0
  %358 = vmatpush1.msra.mxu0 %v347
  %359 = vmatprep.subr.mxu0 0.0
  %360 = vmatpush1.msra.mxu0 %v348
  %361 = vmatprep.subr.mxu0 0.0
  %362 = vmatpush1.msra.mxu0 0.0
  %363 = vmatprep.subr.mxu0 0.0
  %364 = vmatpush1.msra.mxu0 0.0
  %365 = vmatprep.subr.mxu0 0.0
  %366 = vmatpush1.msra.mxu0 0.0
  %367 = vmatprep.subr.mxu0 0.0
  %368 = vmatpush1.msra.mxu0 0.0
  %369 = vmatprep.subr.mxu0 0.0
  %370 = vmatpush1.msra.mxu0 0.0
  %371 = vmatprep.subr.mxu0 0.0
  %372 = vmatpush1.msra.mxu0 0.0
  %373 = vmatprep.subr.mxu0 0.0
  %374 = vmatpush1.msra.mxu0 0.0
  %375 = vmatprep.subr.mxu0 0.0
  %376 = vmatpush1.msra.mxu0 0.0
  %377 = vmatprep.subr.mxu0 0.0
  %378 = vmatpush1.msra.mxu0 0.0
  %379 = vmatprep.subr.mxu0 0.0
  %380 = vmatpush1.msra.mxu0 0.0
  %381 = vmatprep.subr.mxu0 0.0
  %382 = vmatpush1.msra.mxu0 0.0
  %383 = vmatprep.subr.mxu0 0.0
  %384 = vmatpush1.msra.mxu0 0.0
  %385 = vmatprep.subr.mxu0 0.0
  %386 = vmatpush1.msra.mxu0 0.0
  %387 = vmatprep.subr.mxu0 0.0
  %388 = vmatpush1.msra.mxu0 0.0
  %389 = vmatprep.subr.mxu0 0.0
  %390 = vmatpush1.msra.mxu0 0.0
  %391 = vmatprep.subr.mxu0 0.0
  %392 = vmatpush1.msra.mxu0 0.0
  %393 = vmatprep.subr.mxu0 0.0
  %394 = vmatpush1.msra.mxu0 0.0
  %395 = vmatprep.subr.mxu0 0.0
  %396 = vmatpush1.msra.mxu0 0.0
  %397 = vmatprep.subr.mxu0 0.0
  %398 = vmatpush1.msra.mxu0 0.0
  %399 = vmatprep.subr.mxu0 0.0
  %400 = vmatpush1.msra.mxu0 0.0
  %401 = vmatprep.subr.mxu0 0.0
  %402 = vmatpush1.msra.mxu0 0.0
  %403 = vmatprep.subr.mxu0 0.0
  %404 = vmatpush1.msra.mxu0 0.0
  %405 = vmatprep.subr.mxu0 0.0
  %406 = vmatpush1.msra.mxu0 0.0
  %407 = vmatprep.subr.mxu0 0.0
  %408 = vmatpush1.msra.mxu0 0.0
  %409 = vmatprep.subr.mxu0 0.0
  %410 = vmatpush1.msra.mxu0 0.0
  %411 = vmatprep.subr.mxu0 0.0
  %412 = vmatpush1.msra.mxu0 0.0
  %413 = vmatprep.subr.mxu0 0.0
  %414 = vmatpush1.msra.mxu0 0.0
  %415 = vmatprep.subr.mxu0 0.0
  %416 = vmatpush1.msra.mxu0 0.0
  %417 = vmatprep.subr.mxu0 0.0
  %418 = vmatpush1.msra.mxu0 0.0
  %419 = vmatprep.subr.mxu0 0.0
  %420 = vmatpush1.msra.mxu0 0.0
  %421 = vmatprep.mubr.f32.mxu0 0.0
  %422 = vmatmul.mubr.f32.gmra.mrb[0].mxu0 %v355
  %v423 = vpop.f32.mrb[0].mxu0
  %v424 = vadd.f32 %v353, %v423
  %v425 = vpop.f32.mrb[0].mxu0
  %426 = vdwg.mxu0
  %vm427 = vcmask 7168
  %428 = vst.msk [vmem:[%s3] sm:$0xff] %vm427, %v424
  // Predicated region
  $region14: #{tpu_custom_call.1} parent=0 // pred_check
    _
  $region15: #{tpu_custom_call.1} parent=0 // pred_check_branch
    %430 = sbr.rel (0) target = $region17
  $region16: #{tpu_custom_call.1} parent=0 // pred_region
    _
  $region17: #{tpu_custom_call.1} parent=0 // pred_fallthru
    _
  // Predicated region
  $region18: #{tpu_custom_call.1} parent=0 // pred_check
    _
  $region19: #{tpu_custom_call.1} parent=0 // pred_check_branch
    %432 = sbr.rel (0) target = $region21
  $region20: #{tpu_custom_call.1} parent=0 // pred_region
    _
  $region21: #{tpu_custom_call.1} parent=0 // pred_fallthru
    _

</llo_original>
